<compile_context>
chip_gen: v5e
topology: v5e:2x2
jax: 0.10.0
libtpu: 0.0.40
codegen_flags: <defaults>
</compile_context>

<pallas_src>
import functools

import jax
import jax.numpy as jnp
from jax.experimental import pallas as pl
from jax.experimental.pallas import tpu as pltpu


def vae_kernel(x_ref, eps_ref,
               w1_ref, b1_ref,        # fc1
               wml_ref, bml_ref,      # fused fc21||fc22
               w3_ref, b3_ref,        # fc3
               w4_ref, b4_ref,        # fc4
               out_ref):              # packed [recon | mu | logvar | pad]
    latent_dim = eps_ref.shape[-1]
    tb = x_ref.shape[0]
    out_pad = out_ref.shape[-1]

    # ---- encode: h1 = relu(x @ W1 + b1) ------------------------------------
    x = x_ref[...]
    h1 = jnp.dot(x.astype(jnp.bfloat16), w1_ref[...],
                 preferred_element_type=jnp.float32) + b1_ref[...]
    h1 = jnp.maximum(h1, 0.0)

    # ---- fused mu/logvar head: one matmul over (hidden, 2*latent) ----------
    mulv = jnp.dot(h1.astype(jnp.bfloat16), wml_ref[...],
                   preferred_element_type=jnp.float32) + bml_ref[...]
    mu = mulv[:, :latent_dim]
    logvar = mulv[:, latent_dim:]

    # ---- reparameterize: z = mu + eps * exp(0.5 * logvar)  (all f32) -------
    std = jnp.exp(0.5 * logvar)
    z = mu + eps_ref[...] * std

    # ---- decode: sigmoid(relu(z @ W3 + b3) @ W4 + b4) -----------------------
    h3 = jnp.dot(z.astype(jnp.bfloat16), w3_ref[...],
                 preferred_element_type=jnp.float32) + b3_ref[...]
    h3 = jnp.maximum(h3, 0.0)
    logits = jnp.dot(h3.astype(jnp.bfloat16), w4_ref[...],
                     preferred_element_type=jnp.float32) + b4_ref[...]
    # sigmoid via EUP reciprocal (VALU-free divide)
    recon = pl.reciprocal(1.0 + jnp.exp(-logits), approx=True)

    # ---- single lane-dense store: [recon | mu | logvar | zero-pad] ----------
    packed_dim = recon.shape[-1] + 2 * latent_dim
    pieces = [recon, mu, logvar]
    if out_pad > packed_dim:
        pieces.append(jnp.zeros((tb, out_pad - packed_dim), jnp.float32))
    out_ref[...] = jnp.concatenate(pieces, axis=-1)


def vae_forward(x, eps, params, *, tb=None):
    """Whole VAE forward in one Pallas kernel, tiled over the batch."""
    B, input_dim = x.shape
    hidden_dim = params["w1"].shape[1]
    latent_dim = params["w21"].shape[1]
    assert eps.shape == (B, latent_dim)

    # Fuse the two encoder heads into one weight / bias.
    wml = jnp.concatenate([params["w21"], params["w22"]], axis=1)  # (H, 2L)
    bml = jnp.concatenate([params["b21"], params["b22"]], axis=1)  # (1, 2L)

    # bf16 weights feed the MXU; biases stay f32 (added post-accumulation).
    w1 = params["w1"].astype(jnp.bfloat16)
    wml = wml.astype(jnp.bfloat16)
    w3 = params["w3"].astype(jnp.bfloat16)
    w4 = params["w4"].astype(jnp.bfloat16)
    b1, b3, b4 = params["b1"], params["b3"], params["b4"]

    # Lane-dense packed output: recon | mu | logvar, padded up to 128 lanes.
    out_dim = input_dim + 2 * latent_dim
    out_pad = ((out_dim + 127) // 128) * 128

    # Batch tile: largest that divides B, capped at 256 rows.
    if tb is None:
        tb = min(B, 256)
        while B % tb != 0:
            tb //= 2
    assert B % tb == 0 and tb >= 1
    grid = (B // tb,)

    def batch_spec(d):
        return pl.BlockSpec((tb, d), lambda i: (i, 0))

    def resident_spec(arr):
        return pl.BlockSpec(arr.shape, lambda i: (0, 0))

    weights = (w1, b1, wml, bml, w3, b3, w4, b4)
    in_specs = [batch_spec(input_dim), batch_spec(latent_dim)] + \
               [resident_spec(a) for a in weights]
    out_spec = pl.BlockSpec((tb, out_pad), lambda i: (i, 0))

    # Explicit VMEM budget: 2x double-buffered I/O tiles + weights + activation
    # headroom, clamped so it also fits v7x's 64 MiB physical VMEM.
    def nbytes(a):
        return a.size * a.dtype.itemsize
    weight_bytes = sum(nbytes(a) for a in weights)
    io_bytes = tb * (input_dim + latent_dim + out_pad) * 4
    act_bytes = tb * (hidden_dim + 2 * latent_dim + latent_dim
                      + hidden_dim + out_pad) * 4
    est = 2 * weight_bytes + 2 * 2 * io_bytes + act_bytes
    vmem_limit = int(min(max(2 * est, 8 << 20), 48 << 20))

    packed = pl.pallas_call(
        vae_kernel,
        out_shape=jax.ShapeDtypeStruct((B, out_pad), jnp.float32),
        grid=grid,
        in_specs=in_specs,
        out_specs=out_spec,
        compiler_params=pltpu.CompilerParams(
            dimension_semantics=("parallel",),   # v7x: shard batch over both TCs
            vmem_limit_bytes=vmem_limit,
        ),
    )(x, eps, *weights)

    recon = packed[:, :input_dim]
    mu = packed[:, input_dim:input_dim + latent_dim]
    logvar = packed[:, input_dim + latent_dim:out_dim]
    return recon, mu, logvar


def init_params(key, input_dim, hidden_dim, latent_dim):
    """Deterministic init mimicking nn.Linear's U(-1/sqrt(in), 1/sqrt(in)).
    Weights are stored transposed as (in_features, out_features)."""
    def linear(k, fan_in, fan_out):
        kw, kb = jax.random.split(k)
        bound = 1.0 / jnp.sqrt(fan_in)
        w = jax.random.uniform(kw, (fan_in, fan_out), jnp.float32, -bound, bound)
        b = jax.random.uniform(kb, (1, fan_out), jnp.float32, -bound, bound)
        return w, b

    k1, k21, k22, k3, k4 = jax.random.split(key, 5)
    w1, b1 = linear(k1, input_dim, hidden_dim)
    w21, b21 = linear(k21, hidden_dim, latent_dim)
    w22, b22 = linear(k22, hidden_dim, latent_dim)
    w3, b3 = linear(k3, latent_dim, hidden_dim)
    w4, b4 = linear(k4, hidden_dim, input_dim)
    return dict(w1=w1, b1=b1, w21=w21, b21=b21, w22=w22, b22=b22,
                w3=w3, b3=b3, w4=w4, b4=b4)


def vae_forward_ref(x, eps, p):
    """Pure-JAX f32 reference matching the PyTorch module's forward."""
    h1 = jnp.maximum(x @ p["w1"] + p["b1"], 0.0)
    mu = h1 @ p["w21"] + p["b21"]
    logvar = h1 @ p["w22"] + p["b22"]
    z = mu + eps * jnp.exp(0.5 * logvar)
    h3 = jnp.maximum(z @ p["w3"] + p["b3"], 0.0)
    recon = jax.nn.sigmoid(h3 @ p["w4"] + p["b4"])
    return recon, mu, logvar


if __name__ == "__main__":
    # Small shapes consistent with the module: batch=8, input_dim=32,
    # hidden_dim=32, latent_dim=16.
    B, INPUT_DIM, HIDDEN_DIM, LATENT_DIM = 8, 32, 32, 16

    key = jax.random.PRNGKey(0)
    kx, keps, kp = jax.random.split(key, 3)

    x = jax.random.uniform(kx, (B, INPUT_DIM), jnp.float32)
    eps = jax.random.normal(keps, (B, LATENT_DIM), jnp.float32)
    params = init_params(kp, INPUT_DIM, HIDDEN_DIM, LATENT_DIM)

    recon, mu, logvar = vae_forward(x, eps, params)
    jax.block_until_ready((recon, mu, logvar))

    # Sanity check against the pure-JAX f32 reference.  The kernel runs its
    # matmuls with bf16 operands (f32 accumulation), so tolerances are loosened
    # accordingly (~1e-2 level deviations expected).
    recon_r, mu_r, logvar_r = vae_forward_ref(x, eps, params)
    assert recon.shape == (B, INPUT_DIM)
    assert mu.shape == (B, LATENT_DIM) and logvar.shape == (B, LATENT_DIM)
    assert jnp.allclose(recon, recon_r, atol=2e-2), "recon mismatch"
    assert jnp.allclose(mu, mu_r, atol=5e-2, rtol=2e-2), "mu mismatch"
    assert jnp.allclose(logvar, logvar_r, atol=5e-2, rtol=2e-2), "logvar mismatch"

    print("KERNEL_OK")
</pallas_src>

<mosaic_0001>
module attributes {stable_mosaic.version = 11 : i64} {
  func.func @vae_kernel(%arg0: i32, %arg1: memref<8x32xf32, #tpu.memory_space<vmem>>, %arg2: memref<8x16xf32, #tpu.memory_space<vmem>>, %arg3: memref<32x32xbf16, #tpu.memory_space<vmem>>, %arg4: memref<1x32xf32, #tpu.memory_space<vmem>>, %arg5: memref<32x32xbf16, #tpu.memory_space<vmem>>, %arg6: memref<1x32xf32, #tpu.memory_space<vmem>>, %arg7: memref<16x32xbf16, #tpu.memory_space<vmem>>, %arg8: memref<1x32xf32, #tpu.memory_space<vmem>>, %arg9: memref<32x32xbf16, #tpu.memory_space<vmem>>, %arg10: memref<1x32xf32, #tpu.memory_space<vmem>>, %arg11: memref<8x128xf32, #tpu.memory_space<vmem>>) attributes {dimension_semantics = [#tpu.dimension_semantics<parallel>], iteration_bounds = array<i64: 1>, scalar_prefetch = 0 : i64, scratch_operands = 0 : i64, tpu.core_type = #tpu.core_type<tc>, window_params = [{transform_indices = @transform_0, window_bounds = array<i64: 8, 32>}, {transform_indices = @transform_1, window_bounds = array<i64: 8, 16>}, {pipeline_mode = #tpu.pipeline_mode<synchronous>, transform_indices = @transform_2, window_bounds = array<i64: 32, 32>}, {pipeline_mode = #tpu.pipeline_mode<synchronous>, transform_indices = @transform_3, window_bounds = array<i64: 1, 32>}, {pipeline_mode = #tpu.pipeline_mode<synchronous>, transform_indices = @transform_4, window_bounds = array<i64: 32, 32>}, {pipeline_mode = #tpu.pipeline_mode<synchronous>, transform_indices = @transform_5, window_bounds = array<i64: 1, 32>}, {pipeline_mode = #tpu.pipeline_mode<synchronous>, transform_indices = @transform_6, window_bounds = array<i64: 16, 32>}, {pipeline_mode = #tpu.pipeline_mode<synchronous>, transform_indices = @transform_7, window_bounds = array<i64: 1, 32>}, {pipeline_mode = #tpu.pipeline_mode<synchronous>, transform_indices = @transform_8, window_bounds = array<i64: 32, 32>}, {pipeline_mode = #tpu.pipeline_mode<synchronous>, transform_indices = @transform_9, window_bounds = array<i64: 1, 32>}, {transform_indices = @transform_10, window_bounds = array<i64: 8, 128>}]} {
    %c0 = arith.constant 0 : index
    %c0_0 = arith.constant 0 : index
    %0 = vector.load %arg1[%c0, %c0_0] : memref<8x32xf32, #tpu.memory_space<vmem>>, vector<8x32xf32>
    %1 = arith.truncf %0 : vector<8x32xf32> to vector<8x32xbf16>
    %c0_1 = arith.constant 0 : index
    %c0_2 = arith.constant 0 : index
    %2 = vector.load %arg3[%c0_1, %c0_2] : memref<32x32xbf16, #tpu.memory_space<vmem>>, vector<32x32xbf16>
    %cst = arith.constant dense<0.000000e+00> : vector<8x32xf32>
    %3 = tpu.matmul %1, %2, %cst {dimension_numbers = #tpu.dot_dimension_numbers<[1], [0], [0], [1], [0, 0, 1, 1], [], []>} : vector<8x32xbf16>, vector<32x32xbf16>, vector<8x32xf32> -> vector<8x32xf32>
    %c0_3 = arith.constant 0 : index
    %c0_4 = arith.constant 0 : index
    %4 = vector.load %arg4[%c0_3, %c0_4] : memref<1x32xf32, #tpu.memory_space<vmem>>, vector<1x32xf32>
    %5 = vector.broadcast %4 : vector<1x32xf32> to vector<8x32xf32>
    %6 = arith.addf %3, %5 : vector<8x32xf32>
    %cst_5 = arith.constant 0.000000e+00 : f32
    %7 = vector.broadcast %cst_5 : f32 to vector<8x32xf32>
    %8 = arith.maximumf %6, %7 : vector<8x32xf32>
    %9 = arith.truncf %8 : vector<8x32xf32> to vector<8x32xbf16>
    %c0_6 = arith.constant 0 : index
    %c0_7 = arith.constant 0 : index
    %10 = vector.load %arg5[%c0_6, %c0_7] : memref<32x32xbf16, #tpu.memory_space<vmem>>, vector<32x32xbf16>
    %cst_8 = arith.constant dense<0.000000e+00> : vector<8x32xf32>
    %11 = tpu.matmul %9, %10, %cst_8 {dimension_numbers = #tpu.dot_dimension_numbers<[1], [0], [0], [1], [0, 0, 1, 1], [], []>} : vector<8x32xbf16>, vector<32x32xbf16>, vector<8x32xf32> -> vector<8x32xf32>
    %c0_9 = arith.constant 0 : index
    %c0_10 = arith.constant 0 : index
    %12 = vector.load %arg6[%c0_9, %c0_10] : memref<1x32xf32, #tpu.memory_space<vmem>>, vector<1x32xf32>
    %13 = vector.broadcast %12 : vector<1x32xf32> to vector<8x32xf32>
    %14 = arith.addf %11, %13 : vector<8x32xf32>
    %15 = vector.extract_strided_slice %14 {offsets = [0, 0], sizes = [8, 16], strides = [1, 1]} : vector<8x32xf32> to vector<8x16xf32>
    %16 = vector.extract_strided_slice %14 {offsets = [0, 16], sizes = [8, 16], strides = [1, 1]} : vector<8x32xf32> to vector<8x16xf32>
    %cst_11 = arith.constant 5.000000e-01 : f32
    %17 = vector.broadcast %cst_11 : f32 to vector<8x16xf32>
    %18 = arith.mulf %17, %16 : vector<8x16xf32>
    %19 = math.exp %18 : vector<8x16xf32>
    %c0_12 = arith.constant 0 : index
    %c0_13 = arith.constant 0 : index
    %20 = vector.load %arg2[%c0_12, %c0_13] : memref<8x16xf32, #tpu.memory_space<vmem>>, vector<8x16xf32>
    %21 = arith.mulf %20, %19 : vector<8x16xf32>
    %22 = arith.addf %15, %21 : vector<8x16xf32>
    %23 = arith.truncf %22 : vector<8x16xf32> to vector<8x16xbf16>
    %c0_14 = arith.constant 0 : index
    %c0_15 = arith.constant 0 : index
    %24 = vector.load %arg7[%c0_14, %c0_15] : memref<16x32xbf16, #tpu.memory_space<vmem>>, vector<16x32xbf16>
    %cst_16 = arith.constant dense<0.000000e+00> : vector<8x32xf32>
    %25 = tpu.matmul %23, %24, %cst_16 {dimension_numbers = #tpu.dot_dimension_numbers<[1], [0], [0], [1], [0, 0, 1, 1], [], []>} : vector<8x16xbf16>, vector<16x32xbf16>, vector<8x32xf32> -> vector<8x32xf32>
    %c0_17 = arith.constant 0 : index
    %c0_18 = arith.constant 0 : index
    %26 = vector.load %arg8[%c0_17, %c0_18] : memref<1x32xf32, #tpu.memory_space<vmem>>, vector<1x32xf32>
    %27 = vector.broadcast %26 : vector<1x32xf32> to vector<8x32xf32>
    %28 = arith.addf %25, %27 : vector<8x32xf32>
    %cst_19 = arith.constant 0.000000e+00 : f32
    %29 = vector.broadcast %cst_19 : f32 to vector<8x32xf32>
    %30 = arith.maximumf %28, %29 : vector<8x32xf32>
    %31 = arith.truncf %30 : vector<8x32xf32> to vector<8x32xbf16>
    %c0_20 = arith.constant 0 : index
    %c0_21 = arith.constant 0 : index
    %32 = vector.load %arg9[%c0_20, %c0_21] : memref<32x32xbf16, #tpu.memory_space<vmem>>, vector<32x32xbf16>
    %cst_22 = arith.constant dense<0.000000e+00> : vector<8x32xf32>
    %33 = tpu.matmul %31, %32, %cst_22 {dimension_numbers = #tpu.dot_dimension_numbers<[1], [0], [0], [1], [0, 0, 1, 1], [], []>} : vector<8x32xbf16>, vector<32x32xbf16>, vector<8x32xf32> -> vector<8x32xf32>
    %c0_23 = arith.constant 0 : index
    %c0_24 = arith.constant 0 : index
    %34 = vector.load %arg10[%c0_23, %c0_24] : memref<1x32xf32, #tpu.memory_space<vmem>>, vector<1x32xf32>
    %35 = vector.broadcast %34 : vector<1x32xf32> to vector<8x32xf32>
    %36 = arith.addf %33, %35 : vector<8x32xf32>
    %cst_25 = arith.constant 0.000000e+00 : f32
    %37 = vector.broadcast %cst_25 : f32 to vector<8x32xf32>
    %38 = arith.subf %37, %36 : vector<8x32xf32>
    %39 = math.exp %38 : vector<8x32xf32>
    %cst_26 = arith.constant 1.000000e+00 : f32
    %40 = vector.broadcast %cst_26 : f32 to vector<8x32xf32>
    %41 = arith.addf %40, %39 : vector<8x32xf32>
    %42 = tpu.reciprocal %41 {approx = true} : vector<8x32xf32> -> vector<8x32xf32>
    %cst_27 = arith.constant 0.000000e+00 : f32
    %43 = vector.broadcast %cst_27 : f32 to vector<8x64xf32>
    %44 = tpu.concatenate %42, %15, %16, %43 in 1 : vector<8x32xf32>, vector<8x16xf32>, vector<8x16xf32>, vector<8x64xf32> -> vector<8x128xf32>
    %c0_28 = arith.constant 0 : index
    %c0_29 = arith.constant 0 : index
    %45 = vector.load %arg11[%c0_28, %c0_29] : memref<8x128xf32, #tpu.memory_space<vmem>>, vector<8x128xf32>
    tpu.vector_store %arg11[%c0_28, %c0_29], %44 {strides = array<i32>} : memref<8x128xf32, #tpu.memory_space<vmem>>, vector<8x128xf32>,
    return
  }
  func.func @transform_0(%arg0: i32) -> (i32, i32) {
    %c0_i32 = arith.constant 0 : i32
    %c0_i32_0 = arith.constant 0 : i32
    return %arg0, %c0_i32 : i32, i32
  }
  func.func @transform_1(%arg0: i32) -> (i32, i32) {
    %c0_i32 = arith.constant 0 : i32
    %c0_i32_0 = arith.constant 0 : i32
    return %arg0, %c0_i32 : i32, i32
  }
  func.func @transform_2(%arg0: i32) -> (i32, i32) {
    %c0_i32 = arith.constant 0 : i32
    %c0_i32_0 = arith.constant 0 : i32
    %c0_i32_1 = arith.constant 0 : i32
    return %c0_i32, %c0_i32_0 : i32, i32
  }
  func.func @transform_3(%arg0: i32) -> (i32, i32) {
    %c0_i32 = arith.constant 0 : i32
    %c0_i32_0 = arith.constant 0 : i32
    %c0_i32_1 = arith.constant 0 : i32
    return %c0_i32, %c0_i32_0 : i32, i32
  }
  func.func @transform_4(%arg0: i32) -> (i32, i32) {
    %c0_i32 = arith.constant 0 : i32
    %c0_i32_0 = arith.constant 0 : i32
    %c0_i32_1 = arith.constant 0 : i32
    return %c0_i32, %c0_i32_0 : i32, i32
  }
  func.func @transform_5(%arg0: i32) -> (i32, i32) {
    %c0_i32 = arith.constant 0 : i32
    %c0_i32_0 = arith.constant 0 : i32
    %c0_i32_1 = arith.constant 0 : i32
    return %c0_i32, %c0_i32_0 : i32, i32
  }
  func.func @transform_6(%arg0: i32) -> (i32, i32) {
    %c0_i32 = arith.constant 0 : i32
    %c0_i32_0 = arith.constant 0 : i32
    %c0_i32_1 = arith.constant 0 : i32
    return %c0_i32, %c0_i32_0 : i32, i32
  }
  func.func @transform_7(%arg0: i32) -> (i32, i32) {
    %c0_i32 = arith.constant 0 : i32
    %c0_i32_0 = arith.constant 0 : i32
    %c0_i32_1 = arith.constant 0 : i32
    return %c0_i32, %c0_i32_0 : i32, i32
  }
  func.func @transform_8(%arg0: i32) -> (i32, i32) {
    %c0_i32 = arith.constant 0 : i32
    %c0_i32_0 = arith.constant 0 : i32
    %c0_i32_1 = arith.constant 0 : i32
    return %c0_i32, %c0_i32_0 : i32, i32
  }
  func.func @transform_9(%arg0: i32) -> (i32, i32) {
    %c0_i32 = arith.constant 0 : i32
    %c0_i32_0 = arith.constant 0 : i32
    %c0_i32_1 = arith.constant 0 : i32
    return %c0_i32, %c0_i32_0 : i32, i32
  }
  func.func @transform_10(%arg0: i32) -> (i32, i32) {
    %c0_i32 = arith.constant 0 : i32
    %c0_i32_0 = arith.constant 0 : i32
    return %arg0, %c0_i32 : i32, i32
  }
}

</mosaic_0001>

<llo_original>
// kernel: tpu_custom_call.1
$region0: #{tpu_custom_call.1}
  #allocation0 [shape = 'u32[]', space=smem, size = 0x4, offset = 0x4, fixed_abs, tag = 'smem constant byte address 0x4 - core index']
  #allocation1 [shape = 'u32[72,128]{1,0:T(1,128)}', space=vmem, size = 0x9000, scoped, tag = 'internal scratch']
  %s0 = inlined_call_operand.hbm [shape: f32[8,32], index: 0, kind: input, shape index: {}]
  %s1 = inlined_call_operand.hbm [shape: f32[8,16], index: 1, kind: input, shape index: {}]
  %s2 = inlined_call_operand.hbm [shape: bf16[32,32], index: 2, kind: input, shape index: {}]
  %s3 = inlined_call_operand.vmem [shape: f32[1,32], index: 3, kind: input, shape index: {}]
  %s4 = inlined_call_operand.hbm [shape: bf16[32,32], index: 4, kind: input, shape index: {}]
  %s5 = inlined_call_operand.vmem [shape: f32[1,32], index: 5, kind: input, shape index: {}]
  %s6 = inlined_call_operand.hbm [shape: bf16[16,32], index: 6, kind: input, shape index: {}]
  %s7 = inlined_call_operand.vmem [shape: f32[1,32], index: 7, kind: input, shape index: {}]
  %s8 = inlined_call_operand.hbm [shape: bf16[32,32], index: 8, kind: input, shape index: {}]
  %s9 = inlined_call_operand.vmem [shape: f32[1,32], index: 9, kind: input, shape index: {}]
  %s10 = inlined_call_operand.hbm [shape: f32[8,128], index: 10, kind: output, shape index: {}]
  %s11 = sld [smem:[#allocation0]]
  $region74: #{tpu_custom_call.1} parent=0
    _
  %s13 = ssub.s32 1, %s11
  %s14 = scalar_select 0, %s13, %s11
  $region1: #{tpu_custom_call.1} parent=0
    #allocation2 [shape = 'u8[4096]{0}', space=vmem, size = 0x1000, scoped, tag = 'input window, operand 0, single buffered']
    #allocation3 [shape = 's32[1]{0}', space=sflag, size = 0x4, scoped, tag = 'scoped memory for tpu_custom_call.1']
    #allocation4 [shape = 's32[1]{0}', space=sflag, size = 0x4, scoped, tag = 'scoped memory for tpu_custom_call.1']
    #allocation5 [shape = 'u8[4096]{0}', space=vmem, size = 0x1000, scoped, tag = 'input window, operand 1, single buffered']
    #allocation6 [shape = 's32[1]{0}', space=sflag, size = 0x4, scoped, tag = 'scoped memory for tpu_custom_call.1']
    #allocation7 [shape = 'u8[8192]{0}', space=vmem, size = 0x2000, scoped, tag = 'input window, operand 2, single buffered']
    #allocation8 [shape = 'u8[8192]{0}', space=vmem, size = 0x2000, scoped, tag = 'input window, operand 4, single buffered']
    #allocation9 [shape = 's32[1]{0}', space=sflag, size = 0x4, scoped, tag = 'scoped memory for tpu_custom_call.1']
    #allocation10 [shape = 'u8[4096]{0}', space=vmem, size = 0x1000, scoped, tag = 'input window, operand 6, single buffered']
    #allocation11 [shape = 'u8[8192]{0}', space=vmem, size = 0x2000, scoped, tag = 'input window, operand 8, single buffered']
    #allocation12 [shape = 's32[1]{0}', space=sflag, size = 0x4, scoped, tag = 'scoped memory for tpu_custom_call.1']
    #allocation13 [shape = 'u8[4096]{0}', space=vmem, size = 0x1000, scoped, tag = 'output window, operand 0, single buffered']
    %15 = vsyncpa [#allocation3], 0
    %16 = vsyncpa [#allocation6], 0
    %17 = vsyncpa [#allocation9], 0
    %18 = vsyncpa [#allocation12], 0
    %19 = vsyncpa [#allocation4], 0
    // Predicated region
    $region2: #{tpu_custom_call.1} parent=1 // pred_check
      _
    $region3: #{tpu_custom_call.1} parent=1 // pred_check_branch
      %21 = sbr.rel (0) target = $region5
    $region4: #{tpu_custom_call.1} parent=1 // pred_region
      %23 = vsyncadd [#allocation3], 0
      %s25 = sshll.u32 %s0, 4
      %s26 = int_to_ptr.hbm [resolvable:$true] %s25
      %s27 = sshll.u32 [#allocation2], 4
      %s28 = int_to_ptr.vmem [resolvable:$true] %s27
      %30 = dma.hbm_to_vmem [thread:$0]  %s26, 128, %s28, [#allocation3]
    $region5: #{tpu_custom_call.1} parent=1 // pred_fallthru
      _
    // Predicated region
    $region6: #{tpu_custom_call.1} parent=1 // pred_check
      _
    $region7: #{tpu_custom_call.1} parent=1 // pred_check_branch
      %32 = sbr.rel (0) target = $region9
    $region8: #{tpu_custom_call.1} parent=1 // pred_region
      %34 = vsyncadd [#allocation6], 0
      %s36 = sshll.u32 %s1, 4
      %s37 = int_to_ptr.hbm [resolvable:$true] %s36
      %s38 = sshll.u32 [#allocation5], 4
      %s39 = int_to_ptr.vmem [resolvable:$true] %s38
      %41 = dma.hbm_to_vmem [thread:$0]  %s37, 128, %s39, [#allocation6]
    $region9: #{tpu_custom_call.1} parent=1 // pred_fallthru
      _
    // Predicated region
    $region10: #{tpu_custom_call.1} parent=1 // pred_check
      _
    $region11: #{tpu_custom_call.1} parent=1 // pred_check_branch
      %43 = sbr.rel (0) target = $region13
    $region12: #{tpu_custom_call.1} parent=1 // pred_region
      %45 = vsyncadd [#allocation6], 0
      %s46 = sshll.u32 %s2, 4
      %s47 = int_to_ptr.hbm [resolvable:$true] %s46
      %s48 = sshll.u32 [#allocation7], 4
      %s49 = int_to_ptr.vmem [resolvable:$true] %s48
      %54 = dma.hbm_to_vmem [thread:$0]  %s47, 256, %s49, [#allocation6], 64, 64, 4
    $region13: #{tpu_custom_call.1} parent=1 // pred_fallthru
      _
    // Predicated region
    $region14: #{tpu_custom_call.1} parent=1 // pred_check
      _
    $region15: #{tpu_custom_call.1} parent=1 // pred_check_branch
      %56 = sbr.rel (0) target = $region17
    $region16: #{tpu_custom_call.1} parent=1 // pred_region
      _
    $region17: #{tpu_custom_call.1} parent=1 // pred_fallthru
      _
    // Predicated region
    $region18: #{tpu_custom_call.1} parent=1 // pred_check
      _
    $region19: #{tpu_custom_call.1} parent=1 // pred_check_branch
      %58 = sbr.rel (0) target = $region21
    $region20: #{tpu_custom_call.1} parent=1 // pred_region
      %60 = vsyncadd [#allocation9], 0
      %s61 = sshll.u32 %s4, 4
      %s62 = int_to_ptr.hbm [resolvable:$true] %s61
      %s63 = sshll.u32 [#allocation8], 4
      %s64 = int_to_ptr.vmem [resolvable:$true] %s63
      %69 = dma.hbm_to_vmem [thread:$0]  %s62, 256, %s64, [#allocation9], 64, 64, 4
    $region21: #{tpu_custom_call.1} parent=1 // pred_fallthru
      _
    // Predicated region
    $region22: #{tpu_custom_call.1} parent=1 // pred_check
      _
    $region23: #{tpu_custom_call.1} parent=1 // pred_check_branch
      %71 = sbr.rel (0) target = $region25
    $region24: #{tpu_custom_call.1} parent=1 // pred_region
      _
    $region25: #{tpu_custom_call.1} parent=1 // pred_fallthru
      _
    // Predicated region
    $region26: #{tpu_custom_call.1} parent=1 // pred_check
      _
    $region27: #{tpu_custom_call.1} parent=1 // pred_check_branch
      %73 = sbr.rel (0) target = $region29
    $region28: #{tpu_custom_call.1} parent=1 // pred_region
      %75 = vsyncadd [#allocation9], 0
      %s76 = sshll.u32 %s6, 4
      %s77 = int_to_ptr.hbm [resolvable:$true] %s76
      %s78 = sshll.u32 [#allocation10], 4
      %s79 = int_to_ptr.vmem [resolvable:$true] %s78
      %84 = dma.hbm_to_vmem [thread:$0]  %s77, 128, %s79, [#allocation9], 64, 64, 4
    $region29: #{tpu_custom_call.1} parent=1 // pred_fallthru
      _
    // Predicated region
    $region30: #{tpu_custom_call.1} parent=1 // pred_check
      _
    $region31: #{tpu_custom_call.1} parent=1 // pred_check_branch
      %86 = sbr.rel (0) target = $region33
    $region32: #{tpu_custom_call.1} parent=1 // pred_region
      _
    $region33: #{tpu_custom_call.1} parent=1 // pred_fallthru
      _
    // Predicated region
    $region34: #{tpu_custom_call.1} parent=1 // pred_check
      _
    $region35: #{tpu_custom_call.1} parent=1 // pred_check_branch
      %88 = sbr.rel (0) target = $region37
    $region36: #{tpu_custom_call.1} parent=1 // pred_region
      %90 = vsyncadd [#allocation12], 0
      %s91 = sshll.u32 %s8, 4
      %s92 = int_to_ptr.hbm [resolvable:$true] %s91
      %s93 = sshll.u32 [#allocation11], 4
      %s94 = int_to_ptr.vmem [resolvable:$true] %s93
      %99 = dma.hbm_to_vmem [thread:$0]  %s92, 256, %s94, [#allocation12], 64, 64, 4
    $region37: #{tpu_custom_call.1} parent=1 // pred_fallthru
      _
    // Predicated region
    $region38: #{tpu_custom_call.1} parent=1 // pred_check
      _
    $region39: #{tpu_custom_call.1} parent=1 // pred_check_branch
      %101 = sbr.rel (0) target = $region41
    $region40: #{tpu_custom_call.1} parent=1 // pred_region
      _
    $region41: #{tpu_custom_call.1} parent=1 // pred_fallthru
      _
    // Predicated region
    $region42: #{tpu_custom_call.1} parent=1 // pred_check
      _
    $region43: #{tpu_custom_call.1} parent=1 // pred_check_branch
      %103 = sbr.rel (0) target = $region45
    $region44: #{tpu_custom_call.1} parent=1 // pred_region
      %105 = dma.done [#allocation3], 128
    $region45: #{tpu_custom_call.1} parent=1 // pred_fallthru
      _
    // Predicated region
    $region46: #{tpu_custom_call.1} parent=1 // pred_check
      _
    $region47: #{tpu_custom_call.1} parent=1 // pred_check_branch
      %107 = sbr.rel (0) target = $region49
    $region48: #{tpu_custom_call.1} parent=1 // pred_region
      %109 = dma.done [#allocation6], 128
    $region49: #{tpu_custom_call.1} parent=1 // pred_fallthru
      _
    // Predicated region
    $region50: #{tpu_custom_call.1} parent=1 // pred_check
      _
    $region51: #{tpu_custom_call.1} parent=1 // pred_check_branch
      %111 = sbr.rel (0) target = $region53
    $region52: #{tpu_custom_call.1} parent=1 // pred_region
      %113 = dma.done [#allocation6], 256
    $region53: #{tpu_custom_call.1} parent=1 // pred_fallthru
      _
    // Predicated region
    $region54: #{tpu_custom_call.1} parent=1 // pred_check
      _
    $region55: #{tpu_custom_call.1} parent=1 // pred_check_branch
      %115 = sbr.rel (0) target = $region57
    $region56: #{tpu_custom_call.1} parent=1 // pred_region
      %117 = dma.done [#allocation9], 256
    $region57: #{tpu_custom_call.1} parent=1 // pred_fallthru
      _
    // Predicated region
    $region58: #{tpu_custom_call.1} parent=1 // pred_check
      _
    $region59: #{tpu_custom_call.1} parent=1 // pred_check_branch
      %119 = sbr.rel (0) target = $region61
    $region60: #{tpu_custom_call.1} parent=1 // pred_region
      %121 = dma.done [#allocation9], 128
    $region61: #{tpu_custom_call.1} parent=1 // pred_fallthru
      _
    // Predicated region
    $region62: #{tpu_custom_call.1} parent=1 // pred_check
      _
    $region63: #{tpu_custom_call.1} parent=1 // pred_check_branch
      %123 = sbr.rel (0) target = $region65
    $region64: #{tpu_custom_call.1} parent=1 // pred_region
      %125 = dma.done [#allocation12], 256
    $region65: #{tpu_custom_call.1} parent=1 // pred_fallthru
      _
    %v127 = vld [vmem:[#allocation2] sm:$0xff]
    %v128 = vpack.c.bf16 %v127, %v127
    %v129 = vld [vmem:[#allocation7] sm:$0xf]
    %v130 = vld [vmem:[#allocation7 + $0x4] sm:$0xf]
    %v131 = vld [vmem:[#allocation7 + $0x8] sm:$0xf]
    %v132 = vld [vmem:[#allocation7 + $0xc] sm:$0xf]
    %v133 = vld [vmem:[%s3] sm:$0x1]
    %v135 = vperm.slane %v133, 0
    %v141 = vunpack.c.l.b16 %v129
    %v142 = vunpack.c.l.b16 %v130
    %v143 = vunpack.c.l.b16 %v131
    %v144 = vunpack.c.l.b16 %v132
    %v145 = vpack.c.b16 %v142, %v141
    %v146 = vpack.c.b16 %v144, %v143
    %vm149 = vcmask 261120
    %v151 = vsel %vm149, %v128, 0
    %153 = vmatpush.bf16.msra.mxu0 0
    %154 = vmatpush.bf16.msra.mxu0 0
    %155 = vmatpush.bf16.msra.mxu0 0
    %156 = vmatpush.bf16.msra.mxu0 0
    %157 = vmatpush.bf16.msra.mxu0 0
    %158 = vmatpush.bf16.msra.mxu0 0
    %159 = vmatpush.bf16.msra.mxu0 %v146
    %160 = vmatpush.bf16.msra.mxu0 %v145
    %161 = vmatmul.bf16.gmra.mxu0 %v151
    %v162 = vpop.f32.mrf.mxu0
    %v163 = vadd.f32 %v135, %v162
    %v164 = vpop.f32.mrf.mxu0
    %165 = vdwg.mxu0
    %v166 = vmax.f32 %v163, 0.0
    %v167 = vpack.c.bf16 %v166, %v166
    %v168 = vld [vmem:[#allocation8] sm:$0xf]
    %v169 = vld [vmem:[#allocation8 + $0x4] sm:$0xf]
    %v170 = vld [vmem:[#allocation8 + $0x8] sm:$0xf]
    %v171 = vld [vmem:[#allocation8 + $0xc] sm:$0xf]
    %v172 = vld [vmem:[%s5] sm:$0x1]
    %v174 = vperm.slane %v172, 0
    %v180 = vunpack.c.l.b16 %v168
    %v181 = vunpack.c.l.b16 %v169
    %v182 = vunpack.c.l.b16 %v170
    %v183 = vunpack.c.l.b16 %v171
    %v184 = vpack.c.b16 %v181, %v180
    %v185 = vpack.c.b16 %v183, %v182
    %v189 = vsel %vm149, %v167, 0
    %191 = vmatpush.bf16.msra.mxu0 0
    %192 = vmatpush.bf16.msra.mxu0 0
    %193 = vmatpush.bf16.msra.mxu0 0
    %194 = vmatpush.bf16.msra.mxu0 0
    %195 = vmatpush.bf16.msra.mxu0 0
    %196 = vmatpush.bf16.msra.mxu0 0
    %197 = vmatpush.bf16.msra.mxu0 %v185
    %198 = vmatpush.bf16.msra.mxu0 %v184
    %199 = vmatmul.bf16.gmra.mxu0 %v189
    %v200 = vpop.f32.mrf.mxu0
    %v201 = vadd.f32 %v174, %v200
    %v202 = vpop.f32.mrf.mxu0
    %203 = vdwg.mxu0
    %v204 = vmul.f32 %v201, 0.5
    %v205 = vmul.f32 %v204, 1.442695
    %v206 = vpow.pop %v205
    %v207 = vld [vmem:[#allocation5] sm:$0xff]
    %209 = vrot.lane.b32.xlu0 %v206, 112
    %v210 = vpop.permute.xlu0 %209
    %v212 = vmul.f32 %v207, %v210
    %v213 = vadd.f32 %v201, %v212
    %v214 = vpack.c.bf16 %v213, %v213
    %v215 = vld [vmem:[#allocation10] sm:$0xf]
    %v216 = vld [vmem:[#allocation10 + $0x4] sm:$0xf]
    %v217 = vld [vmem:[%s7] sm:$0x1]
    %v219 = vperm.slane %v217, 0
    %v223 = vunpack.c.l.b16 %v215
    %v224 = vunpack.c.l.b16 %v216
    %v225 = vpack.c.b16 %v224, %v223
    %vm227 = vcmask 130048
    %v229 = vsel %vm227, %v214, 0
    %231 = vmatpush.bf16.msra.mxu0 0
    %232 = vmatpush.bf16.msra.mxu0 0
    %233 = vmatpush.bf16.msra.mxu0 0
    %234 = vmatpush.bf16.msra.mxu0 0
    %235 = vmatpush.bf16.msra.mxu0 0
    %236 = vmatpush.bf16.msra.mxu0 0
    %237 = vmatpush.bf16.msra.mxu0 0
    %238 = vmatpush.bf16.msra.mxu0 %v225
    %239 = vmatmul.bf16.gmra.mxu0 %v229
    %v240 = vpop.f32.mrf.mxu0
    %v241 = vadd.f32 %v219, %v240
    %v242 = vpop.f32.mrf.mxu0
    %243 = vdwg.mxu0
    %v244 = vmax.f32 %v241, 0.0
    %v245 = vpack.c.bf16 %v244, %v244
    %v246 = vld [vmem:[#allocation11] sm:$0xf]
    %v247 = vld [vmem:[#allocation11 + $0x4] sm:$0xf]
    %v248 = vld [vmem:[#allocation11 + $0x8] sm:$0xf]
    %v249 = vld [vmem:[#allocation11 + $0xc] sm:$0xf]
    %v250 = vld [vmem:[%s9] sm:$0x1]
    %v252 = vperm.slane %v250, 0
    %v258 = vunpack.c.l.b16 %v246
    %v259 = vunpack.c.l.b16 %v247
    %v260 = vunpack.c.l.b16 %v248
    %v261 = vunpack.c.l.b16 %v249
    %v262 = vpack.c.b16 %v259, %v258
    %v263 = vpack.c.b16 %v261, %v260
    %v267 = vsel %vm149, %v245, 0
    %269 = vmatpush.bf16.msra.mxu0 0
    %270 = vmatpush.bf16.msra.mxu0 0
    %271 = vmatpush.bf16.msra.mxu0 0
    %272 = vmatpush.bf16.msra.mxu0 0
    %273 = vmatpush.bf16.msra.mxu0 0
    %274 = vmatpush.bf16.msra.mxu0 0
    %275 = vmatpush.bf16.msra.mxu0 %v263
    %276 = vmatpush.bf16.msra.mxu0 %v262
    %277 = vmatmul.bf16.gmra.mxu0 %v267
    %v278 = vpop.f32.mrf.mxu0
    %v279 = vadd.f32 %v252, %v278
    %v280 = vpop.f32.mrf.mxu0
    %281 = vdwg.mxu0
    %v282 = vsub.f32 0.0, %v279
    %v283 = vmul.f32 %v282, 1.442695
    %v284 = vpow.pop %v283
    %v285 = vadd.f32 %v284, 1.0
    %v286 = vrcp.pop %v285
    %288 = vrot.lane.b32.xlu0 %v201, 32
    %v289 = vpop.permute.xlu0 %288
    %v291 = vsel %vm149, %v286, %v289
    %vm292 = vcmask 392192
    %v293 = vsel %vm292, %v291, %v289
    %vm294 = vcmask 523264
    %v295 = vsel %vm294, %v293, 0.0
    %296 = vst [vmem:[#allocation13] sm:$0xff] %v295
    // Predicated region
    $region66: #{tpu_custom_call.1} parent=1 // pred_check
      _
    $region67: #{tpu_custom_call.1} parent=1 // pred_check_branch
      %298 = sbr.rel (0) target = $region69
    $region68: #{tpu_custom_call.1} parent=1 // pred_region
      %300 = vsyncadd [#allocation4], 0
      %s302 = sshll.u32 [#allocation13], 4
      %s303 = int_to_ptr.vmem [resolvable:$true] %s302
      %s304 = sshll.u32 %s10, 4
      %s305 = int_to_ptr.hbm [resolvable:$true] %s304
      %307 = dma.vmem_to_hbm [thread:$0]  %s303, 128, %s305, [#allocation4]
    $region69: #{tpu_custom_call.1} parent=1 // pred_fallthru
      _
    // Predicated region
    $region70: #{tpu_custom_call.1} parent=1 // pred_check
      _
    $region71: #{tpu_custom_call.1} parent=1 // pred_check_branch
      %309 = sbr.rel (0) target = $region73
    $region72: #{tpu_custom_call.1} parent=1 // pred_region
      %311 = dma.done [#allocation4], 128
    $region73: #{tpu_custom_call.1} parent=1 // pred_fallthru
      _
    %312 = vsyncpa [#allocation3], 1
    %313 = vsyncpa [#allocation6], 1
    %314 = vsyncpa [#allocation9], 1
    %315 = vsyncpa [#allocation12], 1
    %316 = vsyncpa [#allocation4], 1

</llo_original>
